<compile_context>
chip_gen: v7x
topology: tpu7x:2x2x1
jax: 0.10.0
libtpu: 0.0.40
codegen_flags: <defaults>
</compile_context>

<pallas_src>
import math
from functools import partial

import jax
import jax.numpy as jnp
import numpy as np
from jax import lax
from jax.experimental import pallas as pl
from jax.experimental.pallas import tpu as pltpu


def _round_up(x: int, m: int) -> int:
    return ((x + m - 1) // m) * m


def _attention_kernel(x_full_ref, xq_ref, wq_ref, bq_ref, wkv_ref, bkv_ref,
                      wo_ref, bo_ref, out_ref,
                      kv_scr, ctx_scr,
                      *, num_heads: int, head_dim: int, heads_per_group: int,
                      hidden: int, tq: int, s_pad: int, s_real: int,
                      kv_chunk: int):
    qi = pl.program_id(1)

    # --- K/V projection for the whole (padded) sequence of this batch element.
    # Computed once per batch (first q-tile), chunked over rows so the f32
    # intermediate stays register-sized, stored as bf16 into the packed KV scratch.
    @pl.when(qi == 0)
    def _():
        for s0 in range(0, s_pad, kv_chunk):
            cs = min(kv_chunk, s_pad - s0)
            xc = x_full_ref[0, s0:s0 + cs, :]                          # (cs, H) bf16
            kv = jnp.dot(xc, wkv_ref[...],
                         preferred_element_type=jnp.float32) + bkv_ref[0]
            kv_scr[s0:s0 + cs, :] = kv.astype(jnp.bfloat16)

    # --- Q projection for this q-tile; 1/sqrt(head_dim) folded into wq/bq.
    q = jnp.dot(xq_ref[0], wq_ref[...],
                preferred_element_type=jnp.float32) + bq_ref[0]
    q_bf = q.astype(jnp.bfloat16)

    # Key-padding bias (only generated when the sequence was padded).
    if s_real < s_pad:
        col = lax.broadcasted_iota(jnp.int32, (tq, s_pad), 1)
        key_bias = jnp.where(col < s_real, 0.0, -1e30).astype(jnp.float32)
    else:
        key_bias = None

    gw = heads_per_group * head_dim          # lane width of one head-group
    n_groups = num_heads // heads_per_group
    for g in range(n_groups):
        lo = g * gw
        qg = q_bf[:, lo:lo + gw]                                       # (tq,  gw) bf16
        kg = kv_scr[:, lo:lo + gw]                                     # (S_p, gw) bf16
        vg = kv_scr[:, hidden + lo:hidden + lo + gw]                   # (S_p, gw) bf16

        ctx_parts = []
        for hh in range(heads_per_group):
            a = hh * head_dim
            b = a + head_dim
            qh = qg[:, a:b]
            kh = kg[:, a:b]
            vh = vg[:, a:b]

            # q_h @ k_h^T without materializing the transpose (contract last dims).
            scores = lax.dot_general(qh, kh, (((1,), (1,)), ((), ())),
                                     preferred_element_type=jnp.float32)
            if key_bias is not None:
                scores = scores + key_bias

            # Numerically-stable softmax in f32 (matches torch softmax).
            m = jnp.max(scores, axis=-1, keepdims=True)
            e = jnp.exp(scores - m)
            denom = jnp.sum(e, axis=-1, keepdims=True)
            probs = e * pl.reciprocal(denom, approx=True)
            # attention dropout is identity in eval mode

            ctx_parts.append(jnp.dot(probs.astype(jnp.bfloat16), vh,
                                     preferred_element_type=jnp.float32))

        ctx_g = ctx_parts[0] if heads_per_group == 1 else jnp.concatenate(ctx_parts, axis=1)
        # One lane-aligned store per head-group (gw == 128 for real ViT head_dim=64).
        ctx_scr[:, lo:lo + gw] = ctx_g.astype(jnp.bfloat16)

    # Output dense (QuantViTSelfOutput.dense); dropout identity in eval mode.
    out = jnp.dot(ctx_scr[...], wo_ref[...],
                  preferred_element_type=jnp.float32) + bo_ref[0]
    out_ref[0] = out.astype(out_ref.dtype)


def quant_vit_attention(x, wq, bq, wk, bk, wv, bv, wo, bo, *, num_heads: int):
    """x: [B, S, H] float32. Returns attention_output: [B, S, H] float32."""
    B, S, H = x.shape
    assert H % num_heads == 0
    head_dim = H // num_heads
    inv_sqrt_d = 1.0 / math.sqrt(head_dim)

    # Fold the score scaling into the query projection (free); pack K|V into a single
    # (H, 2H) weight / (1, 2H) bias; ship bf16 weights (MXU-native). Biases stay f32.
    wq_b = (wq * inv_sqrt_d).astype(jnp.bfloat16)
    bq_s = (bq * inv_sqrt_d).astype(jnp.float32).reshape(1, H)
    wkv_b = jnp.concatenate([wk, wv], axis=1).astype(jnp.bfloat16)      # (H, 2H)
    bkv_s = jnp.concatenate([bk, bv]).astype(jnp.float32).reshape(1, 2 * H)
    wo_b = wo.astype(jnp.bfloat16)
    bo_s = bo.astype(jnp.float32).reshape(1, H)

    # Query-tile the (padded) sequence. Padded keys are masked inside the kernel,
    # padded query rows are sliced off afterwards.
    if S <= 128:
        tq = _round_up(S, 8)
        s_pad = tq
    else:
        tq = 128
        s_pad = _round_up(S, tq)
    n_q = s_pad // tq

    x_bf = x.astype(jnp.bfloat16)
    if s_pad != S:
        x_bf = jnp.pad(x_bf, ((0, 0), (0, s_pad - S), (0, 0)))

    # Head grouping so per-group loads/stores are 128-lane aligned (e.g. 2 x d=64).
    heads_per_group = 1
    if head_dim < 128 and 128 % head_dim == 0:
        heads_per_group = math.gcd(128 // head_dim, num_heads)

    kv_chunk = min(256, s_pad)

    # VMEM budget -> explicit limit (covers v5e 16 MiB / v7x 32 MiB scoped defaults).
    bs = 2  # bf16 bytes
    vmem_bytes = (2 * s_pad * H * bs                 # x_full (double-buffered)
                  + 2 * tq * H * bs                  # x q-tile
                  + 2 * (H * H + 2 * H * H + H * H) * bs   # wq, wkv, wo
                  + 2 * tq * H * 4                   # output blocks (f32)
                  + s_pad * 2 * H * bs               # KV scratch
                  + tq * H * bs)                     # ctx scratch
    vmem_limit = int(min(max(int(vmem_bytes * 1.5) + (4 << 20), 32 << 20), 128 << 20))

    x_full_spec = pl.BlockSpec((1, s_pad, H), lambda b, qi: (b, 0, 0))
    x_q_spec = pl.BlockSpec((1, tq, H), lambda b, qi: (b, qi, 0))
    wq_spec = pl.BlockSpec((H, H), lambda b, qi: (0, 0))
    bq_spec = pl.BlockSpec((1, H), lambda b, qi: (0, 0))
    wkv_spec = pl.BlockSpec((H, 2 * H), lambda b, qi: (0, 0))
    bkv_spec = pl.BlockSpec((1, 2 * H), lambda b, qi: (0, 0))
    o_spec = pl.BlockSpec((1, tq, H), lambda b, qi: (b, qi, 0))

    kernel = partial(_attention_kernel, num_heads=num_heads, head_dim=head_dim,
                     heads_per_group=heads_per_group, hidden=H, tq=tq,
                     s_pad=s_pad, s_real=S, kv_chunk=kv_chunk)

    out = pl.pallas_call(
        kernel,
        out_shape=jax.ShapeDtypeStruct((B, s_pad, H), x.dtype),
        grid_spec=pltpu.PrefetchScalarGridSpec(
            num_scalar_prefetch=0,
            grid=(B, n_q),
            in_specs=[x_full_spec, x_q_spec, wq_spec, bq_spec,
                      wkv_spec, bkv_spec, wq_spec, bq_spec],
            out_specs=o_spec,
            scratch_shapes=[
                pltpu.VMEM((s_pad, 2 * H), jnp.bfloat16),   # packed K|V scratch
                pltpu.VMEM((tq, H), jnp.bfloat16),          # merged-head ctx, feeds Wo
            ],
        ),
        compiler_params=pltpu.CompilerParams(
            dimension_semantics=("parallel", "arbitrary"),
            vmem_limit_bytes=vmem_limit),
    )(x_bf, x_bf, wq_b, bq_s, wkv_b, bkv_s, wo_b, bo_s)

    if s_pad != S:
        out = out[:, :S, :]
    return out


def _reference(x, wq, bq, wk, bk, wv, bv, wo, bo, *, num_heads):
    B, S, H = x.shape
    d = H // num_heads
    q = x @ wq + bq
    k = x @ wk + bk
    v = x @ wv + bv
    def split(t):  # (B,S,H) -> (B,nh,S,d)
        return t.reshape(B, S, num_heads, d).transpose(0, 2, 1, 3)
    qh, kh, vh = split(q), split(k), split(v)
    scores = jnp.einsum('bhqd,bhkd->bhqk', qh, kh) / math.sqrt(d)
    probs = jax.nn.softmax(scores, axis=-1)
    ctx = jnp.einsum('bhqk,bhkd->bhqd', probs, vh)
    ctx = ctx.transpose(0, 2, 1, 3).reshape(B, S, H)
    return ctx @ wo + bo


def _run_case(B, S, H, NH, seed):
    key = jax.random.PRNGKey(seed)
    ks = jax.random.split(key, 9)
    scale = 0.02
    x  = jax.random.normal(ks[0], (B, S, H), dtype=jnp.float32)
    wq = scale * jax.random.normal(ks[1], (H, H), dtype=jnp.float32)
    bq = scale * jax.random.normal(ks[2], (H,), dtype=jnp.float32)
    wk = scale * jax.random.normal(ks[3], (H, H), dtype=jnp.float32)
    bk = scale * jax.random.normal(ks[4], (H,), dtype=jnp.float32)
    wv = scale * jax.random.normal(ks[5], (H, H), dtype=jnp.float32)
    bv = scale * jax.random.normal(ks[6], (H,), dtype=jnp.float32)
    wo = scale * jax.random.normal(ks[7], (H, H), dtype=jnp.float32)
    bo = scale * jax.random.normal(ks[8], (H,), dtype=jnp.float32)

    out = quant_vit_attention(x, wq, bq, wk, bk, wv, bv, wo, bo, num_heads=NH)
    out = jax.block_until_ready(out)
    ref = _reference(x, wq, bq, wk, bk, wv, bv, wo, bo, num_heads=NH)
    assert out.shape == (B, S, H)
    # bf16 MXU operands (f32 accumulation, f32 softmax) -> bf16-level tolerance.
    assert np.allclose(np.asarray(out), np.asarray(ref), rtol=2e-2, atol=2e-3), \
        f"Pallas output mismatch vs JAX reference (B={B},S={S},H={H},NH={NH})"


if __name__ == "__main__":
    # Small ViT-like config: batch=2, seq=8, hidden=32, heads=4 (head_dim=8).
    _run_case(B=2, S=8, H=32, NH=4, seed=0)
    # Sequence not a multiple of 8 (exercises padding + key masking), like ViT's S=197.
    _run_case(B=2, S=13, H=32, NH=4, seed=0)
    # Multi-q-tile path (S > 128, padded to 256, two q-tiles reusing KV scratch).
    _run_case(B=1, S=144, H=32, NH=4, seed=0)

    # TODO(synk): weight/act fake-quant paths of QuantLinear are disabled by default
    # (use_weight_quant=False, use_act_quant=False) and are not implemented.
    print("KERNEL_OK")
</pallas_src>

<mosaic_0001>
module attributes {stable_mosaic.version = 11 : i64} {
  func.func @_attention_kernel(%arg0: i32, %arg1: i32, %arg2: memref<1x8x32xbf16, #tpu.memory_space<vmem>>, %arg3: memref<1x8x32xbf16, #tpu.memory_space<vmem>>, %arg4: memref<32x32xbf16, #tpu.memory_space<vmem>>, %arg5: memref<1x32xf32, #tpu.memory_space<vmem>>, %arg6: memref<32x64xbf16, #tpu.memory_space<vmem>>, %arg7: memref<1x64xf32, #tpu.memory_space<vmem>>, %arg8: memref<32x32xbf16, #tpu.memory_space<vmem>>, %arg9: memref<1x32xf32, #tpu.memory_space<vmem>>, %arg10: memref<1x8x32xf32, #tpu.memory_space<vmem>>, %arg11: memref<8x64xbf16, #tpu.memory_space<vmem>>, %arg12: memref<8x32xbf16, #tpu.memory_space<vmem>>) attributes {dimension_semantics = [#tpu.dimension_semantics<parallel>, #tpu.dimension_semantics<arbitrary>], iteration_bounds = array<i64: 2, 1>, scalar_prefetch = 0 : i64, scratch_operands = 2 : i64, tpu.core_type = #tpu.core_type<tc>, window_params = [{transform_indices = @transform_0, window_bounds = array<i64: 1, 8, 32>}, {transform_indices = @transform_1, window_bounds = array<i64: 1, 8, 32>}, {pipeline_mode = #tpu.pipeline_mode<synchronous>, transform_indices = @transform_2, window_bounds = array<i64: 32, 32>}, {pipeline_mode = #tpu.pipeline_mode<synchronous>, transform_indices = @transform_3, window_bounds = array<i64: 1, 32>}, {pipeline_mode = #tpu.pipeline_mode<synchronous>, transform_indices = @transform_4, window_bounds = array<i64: 32, 64>}, {pipeline_mode = #tpu.pipeline_mode<synchronous>, transform_indices = @transform_5, window_bounds = array<i64: 1, 64>}, {pipeline_mode = #tpu.pipeline_mode<synchronous>, transform_indices = @transform_6, window_bounds = array<i64: 32, 32>}, {pipeline_mode = #tpu.pipeline_mode<synchronous>, transform_indices = @transform_7, window_bounds = array<i64: 1, 32>}, {transform_indices = @transform_8, window_bounds = array<i64: 1, 8, 32>}]} {
    %c0_i32 = arith.constant 0 : i32
    %0 = arith.cmpi eq, %arg1, %c0_i32 : i32
    %1 = arith.extui %0 : i1 to i32
    %c0_i32_0 = arith.constant 0 : i32
    %2 = arith.cmpi ne, %1, %c0_i32_0 : i32
    scf.if %2 {
      %c0_38 = arith.constant 0 : index
      %c0_39 = arith.constant 0 : index
      %c0_40 = arith.constant 0 : index
      %93 = vector.load %arg2[%c0_38, %c0_39, %c0_40] : memref<1x8x32xbf16, #tpu.memory_space<vmem>>, vector<1x8x32xbf16>
      %94 = vector.shape_cast %93 : vector<1x8x32xbf16> to vector<8x32xbf16>
      %c0_41 = arith.constant 0 : index
      %c0_42 = arith.constant 0 : index
      %95 = vector.load %arg6[%c0_41, %c0_42] : memref<32x64xbf16, #tpu.memory_space<vmem>>, vector<32x64xbf16>
      %cst_43 = arith.constant dense<0.000000e+00> : vector<8x64xf32>
      %96 = tpu.matmul %94, %95, %cst_43 {dimension_numbers = #tpu.dot_dimension_numbers<[1], [0], [0], [1], [0, 0, 1, 1], [], []>} : vector<8x32xbf16>, vector<32x64xbf16>, vector<8x64xf32> -> vector<8x64xf32>
      %c0_44 = arith.constant 0 : index
      %c0_45 = arith.constant 0 : index
      %97 = vector.load %arg7[%c0_44, %c0_45] : memref<1x64xf32, #tpu.memory_space<vmem>>, vector<1x64xf32>
      %98 = vector.shape_cast %97 : vector<1x64xf32> to vector<64xf32>
      %99 = vector.shape_cast %98 : vector<64xf32> to vector<1x64xf32>
      %100 = vector.broadcast %99 : vector<1x64xf32> to vector<8x64xf32>
      %101 = arith.addf %96, %100 : vector<8x64xf32>
      %102 = arith.truncf %101 : vector<8x64xf32> to vector<8x64xbf16>
      %c0_46 = arith.constant 0 : index
      %c0_47 = arith.constant 0 : index
      %103 = vector.load %arg11[%c0_46, %c0_47] : memref<8x64xbf16, #tpu.memory_space<vmem>>, vector<8x64xbf16>
      tpu.vector_store %arg11[%c0_46, %c0_47], %102 {strides = array<i32>} : memref<8x64xbf16, #tpu.memory_space<vmem>>, vector<8x64xbf16>,
    } else {
    }
    %c0 = arith.constant 0 : index
    %c0_1 = arith.constant 0 : index
    %c0_2 = arith.constant 0 : index
    %3 = vector.load %arg3[%c0, %c0_1, %c0_2] : memref<1x8x32xbf16, #tpu.memory_space<vmem>>, vector<1x8x32xbf16>
    %4 = vector.shape_cast %3 : vector<1x8x32xbf16> to vector<8x32xbf16>
    %c0_3 = arith.constant 0 : index
    %c0_4 = arith.constant 0 : index
    %5 = vector.load %arg4[%c0_3, %c0_4] : memref<32x32xbf16, #tpu.memory_space<vmem>>, vector<32x32xbf16>
    %cst = arith.constant dense<0.000000e+00> : vector<8x32xf32>
    %6 = tpu.matmul %4, %5, %cst {dimension_numbers = #tpu.dot_dimension_numbers<[1], [0], [0], [1], [0, 0, 1, 1], [], []>} : vector<8x32xbf16>, vector<32x32xbf16>, vector<8x32xf32> -> vector<8x32xf32>
    %c0_5 = arith.constant 0 : index
    %c0_6 = arith.constant 0 : index
    %7 = vector.load %arg5[%c0_5, %c0_6] : memref<1x32xf32, #tpu.memory_space<vmem>>, vector<1x32xf32>
    %8 = vector.shape_cast %7 : vector<1x32xf32> to vector<32xf32>
    %9 = vector.shape_cast %8 : vector<32xf32> to vector<1x32xf32>
    %10 = vector.broadcast %9 : vector<1x32xf32> to vector<8x32xf32>
    %11 = arith.addf %6, %10 : vector<8x32xf32>
    %12 = arith.truncf %11 : vector<8x32xf32> to vector<8x32xbf16>
    %c0_7 = arith.constant 0 : index
    %c0_8 = arith.constant 0 : index
    %13 = vector.load %arg11[%c0_7, %c0_8] : memref<8x64xbf16, #tpu.memory_space<vmem>>, vector<8x32xbf16>
    %c0_9 = arith.constant 0 : index
    %c32 = arith.constant 32 : index
    %14 = vector.load %arg11[%c0_9, %c32] : memref<8x64xbf16, #tpu.memory_space<vmem>>, vector<8x32xbf16>
    %15 = vector.extract_strided_slice %12 {offsets = [0, 0], sizes = [8, 8], strides = [1, 1]} : vector<8x32xbf16> to vector<8x8xbf16>
    %16 = vector.extract_strided_slice %13 {offsets = [0, 0], sizes = [8, 8], strides = [1, 1]} : vector<8x32xbf16> to vector<8x8xbf16>
    %17 = vector.extract_strided_slice %14 {offsets = [0, 0], sizes = [8, 8], strides = [1, 1]} : vector<8x32xbf16> to vector<8x8xbf16>
    %cst_10 = arith.constant dense<0.000000e+00> : vector<8x8xf32>
    %18 = tpu.matmul %15, %16, %cst_10 {dimension_numbers = #tpu.dot_dimension_numbers<[1], [1], [0], [0], [0, 0, 1, 0], [], []>} : vector<8x8xbf16>, vector<8x8xbf16>, vector<8x8xf32> -> vector<8x8xf32>
    %cst_11 = arith.constant dense<0xFF800000> : vector<8xf32>
    %19 = vector.multi_reduction <maximumf>, %18, %cst_11 [1] : vector<8x8xf32> to vector<8xf32>
    %20 = vector.shape_cast %19 : vector<8xf32> to vector<8x1xf32>
    %21 = vector.broadcast %20 : vector<8x1xf32> to vector<8x8xf32>
    %22 = arith.subf %18, %21 : vector<8x8xf32>
    %23 = math.exp %22 : vector<8x8xf32>
    %cst_12 = arith.constant dense<0.000000e+00> : vector<8xf32>
    %24 = vector.multi_reduction <add>, %23, %cst_12 [1] : vector<8x8xf32> to vector<8xf32>
    %25 = vector.shape_cast %24 : vector<8xf32> to vector<8x1xf32>
    %26 = tpu.reciprocal %25 {approx = true} : vector<8x1xf32> -> vector<8x1xf32>
    %27 = vector.broadcast %26 : vector<8x1xf32> to vector<8x8xf32>
    %28 = arith.mulf %23, %27 : vector<8x8xf32>
    %29 = arith.truncf %28 : vector<8x8xf32> to vector<8x8xbf16>
    %cst_13 = arith.constant dense<0.000000e+00> : vector<8x8xf32>
    %30 = tpu.matmul %29, %17, %cst_13 {dimension_numbers = #tpu.dot_dimension_numbers<[1], [0], [0], [1], [0, 0, 1, 1], [], []>} : vector<8x8xbf16>, vector<8x8xbf16>, vector<8x8xf32> -> vector<8x8xf32>
    %31 = vector.extract_strided_slice %12 {offsets = [0, 8], sizes = [8, 8], strides = [1, 1]} : vector<8x32xbf16> to vector<8x8xbf16>
    %32 = vector.extract_strided_slice %13 {offsets = [0, 8], sizes = [8, 8], strides = [1, 1]} : vector<8x32xbf16> to vector<8x8xbf16>
    %33 = vector.extract_strided_slice %14 {offsets = [0, 8], sizes = [8, 8], strides = [1, 1]} : vector<8x32xbf16> to vector<8x8xbf16>
    %cst_14 = arith.constant dense<0.000000e+00> : vector<8x8xf32>
    %34 = tpu.matmul %31, %32, %cst_14 {dimension_numbers = #tpu.dot_dimension_numbers<[1], [1], [0], [0], [0, 0, 1, 0], [], []>} : vector<8x8xbf16>, vector<8x8xbf16>, vector<8x8xf32> -> vector<8x8xf32>
    %cst_15 = arith.constant dense<0xFF800000> : vector<8xf32>
    %35 = vector.multi_reduction <maximumf>, %34, %cst_15 [1] : vector<8x8xf32> to vector<8xf32>
    %36 = vector.shape_cast %35 : vector<8xf32> to vector<8x1xf32>
    %37 = vector.broadcast %36 : vector<8x1xf32> to vector<8x8xf32>
    %38 = arith.subf %34, %37 : vector<8x8xf32>
    %39 = math.exp %38 : vector<8x8xf32>
    %cst_16 = arith.constant dense<0.000000e+00> : vector<8xf32>
    %40 = vector.multi_reduction <add>, %39, %cst_16 [1] : vector<8x8xf32> to vector<8xf32>
    %41 = vector.shape_cast %40 : vector<8xf32> to vector<8x1xf32>
    %42 = tpu.reciprocal %41 {approx = true} : vector<8x1xf32> -> vector<8x1xf32>
    %43 = vector.broadcast %42 : vector<8x1xf32> to vector<8x8xf32>
    %44 = arith.mulf %39, %43 : vector<8x8xf32>
    %45 = arith.truncf %44 : vector<8x8xf32> to vector<8x8xbf16>
    %cst_17 = arith.constant dense<0.000000e+00> : vector<8x8xf32>
    %46 = tpu.matmul %45, %33, %cst_17 {dimension_numbers = #tpu.dot_dimension_numbers<[1], [0], [0], [1], [0, 0, 1, 1], [], []>} : vector<8x8xbf16>, vector<8x8xbf16>, vector<8x8xf32> -> vector<8x8xf32>
    %47 = vector.extract_strided_slice %12 {offsets = [0, 16], sizes = [8, 8], strides = [1, 1]} : vector<8x32xbf16> to vector<8x8xbf16>
    %48 = vector.extract_strided_slice %13 {offsets = [0, 16], sizes = [8, 8], strides = [1, 1]} : vector<8x32xbf16> to vector<8x8xbf16>
    %49 = vector.extract_strided_slice %14 {offsets = [0, 16], sizes = [8, 8], strides = [1, 1]} : vector<8x32xbf16> to vector<8x8xbf16>
    %cst_18 = arith.constant dense<0.000000e+00> : vector<8x8xf32>
    %50 = tpu.matmul %47, %48, %cst_18 {dimension_numbers = #tpu.dot_dimension_numbers<[1], [1], [0], [0], [0, 0, 1, 0], [], []>} : vector<8x8xbf16>, vector<8x8xbf16>, vector<8x8xf32> -> vector<8x8xf32>
    %cst_19 = arith.constant dense<0xFF800000> : vector<8xf32>
    %51 = vector.multi_reduction <maximumf>, %50, %cst_19 [1] : vector<8x8xf32> to vector<8xf32>
    %52 = vector.shape_cast %51 : vector<8xf32> to vector<8x1xf32>
    %53 = vector.broadcast %52 : vector<8x1xf32> to vector<8x8xf32>
    %54 = arith.subf %50, %53 : vector<8x8xf32>
    %55 = math.exp %54 : vector<8x8xf32>
    %cst_20 = arith.constant dense<0.000000e+00> : vector<8xf32>
    %56 = vector.multi_reduction <add>, %55, %cst_20 [1] : vector<8x8xf32> to vector<8xf32>
    %57 = vector.shape_cast %56 : vector<8xf32> to vector<8x1xf32>
    %58 = tpu.reciprocal %57 {approx = true} : vector<8x1xf32> -> vector<8x1xf32>
    %59 = vector.broadcast %58 : vector<8x1xf32> to vector<8x8xf32>
    %60 = arith.mulf %55, %59 : vector<8x8xf32>
    %61 = arith.truncf %60 : vector<8x8xf32> to vector<8x8xbf16>
    %cst_21 = arith.constant dense<0.000000e+00> : vector<8x8xf32>
    %62 = tpu.matmul %61, %49, %cst_21 {dimension_numbers = #tpu.dot_dimension_numbers<[1], [0], [0], [1], [0, 0, 1, 1], [], []>} : vector<8x8xbf16>, vector<8x8xbf16>, vector<8x8xf32> -> vector<8x8xf32>
    %63 = vector.extract_strided_slice %12 {offsets = [0, 24], sizes = [8, 8], strides = [1, 1]} : vector<8x32xbf16> to vector<8x8xbf16>
    %64 = vector.extract_strided_slice %13 {offsets = [0, 24], sizes = [8, 8], strides = [1, 1]} : vector<8x32xbf16> to vector<8x8xbf16>
    %65 = vector.extract_strided_slice %14 {offsets = [0, 24], sizes = [8, 8], strides = [1, 1]} : vector<8x32xbf16> to vector<8x8xbf16>
    %cst_22 = arith.constant dense<0.000000e+00> : vector<8x8xf32>
    %66 = tpu.matmul %63, %64, %cst_22 {dimension_numbers = #tpu.dot_dimension_numbers<[1], [1], [0], [0], [0, 0, 1, 0], [], []>} : vector<8x8xbf16>, vector<8x8xbf16>, vector<8x8xf32> -> vector<8x8xf32>
    %cst_23 = arith.constant dense<0xFF800000> : vector<8xf32>
    %67 = vector.multi_reduction <maximumf>, %66, %cst_23 [1] : vector<8x8xf32> to vector<8xf32>
    %68 = vector.shape_cast %67 : vector<8xf32> to vector<8x1xf32>
    %69 = vector.broadcast %68 : vector<8x1xf32> to vector<8x8xf32>
    %70 = arith.subf %66, %69 : vector<8x8xf32>
    %71 = math.exp %70 : vector<8x8xf32>
    %cst_24 = arith.constant dense<0.000000e+00> : vector<8xf32>
    %72 = vector.multi_reduction <add>, %71, %cst_24 [1] : vector<8x8xf32> to vector<8xf32>
    %73 = vector.shape_cast %72 : vector<8xf32> to vector<8x1xf32>
    %74 = tpu.reciprocal %73 {approx = true} : vector<8x1xf32> -> vector<8x1xf32>
    %75 = vector.broadcast %74 : vector<8x1xf32> to vector<8x8xf32>
    %76 = arith.mulf %71, %75 : vector<8x8xf32>
    %77 = arith.truncf %76 : vector<8x8xf32> to vector<8x8xbf16>
    %cst_25 = arith.constant dense<0.000000e+00> : vector<8x8xf32>
    %78 = tpu.matmul %77, %65, %cst_25 {dimension_numbers = #tpu.dot_dimension_numbers<[1], [0], [0], [1], [0, 0, 1, 1], [], []>} : vector<8x8xbf16>, vector<8x8xbf16>, vector<8x8xf32> -> vector<8x8xf32>
    %79 = tpu.concatenate %30, %46, %62, %78 in 1 : vector<8x8xf32>, vector<8x8xf32>, vector<8x8xf32>, vector<8x8xf32> -> vector<8x32xf32>
    %80 = arith.truncf %79 : vector<8x32xf32> to vector<8x32xbf16>
    %c0_26 = arith.constant 0 : index
    %c0_27 = arith.constant 0 : index
    %81 = vector.load %arg12[%c0_26, %c0_27] : memref<8x32xbf16, #tpu.memory_space<vmem>>, vector<8x32xbf16>
    tpu.vector_store %arg12[%c0_26, %c0_27], %80 {strides = array<i32>} : memref<8x32xbf16, #tpu.memory_space<vmem>>, vector<8x32xbf16>,
    %c0_28 = arith.constant 0 : index
    %c0_29 = arith.constant 0 : index
    %82 = vector.load %arg12[%c0_28, %c0_29] : memref<8x32xbf16, #tpu.memory_space<vmem>>, vector<8x32xbf16>
    %c0_30 = arith.constant 0 : index
    %c0_31 = arith.constant 0 : index
    %83 = vector.load %arg8[%c0_30, %c0_31] : memref<32x32xbf16, #tpu.memory_space<vmem>>, vector<32x32xbf16>
    %cst_32 = arith.constant dense<0.000000e+00> : vector<8x32xf32>
    %84 = tpu.matmul %82, %83, %cst_32 {dimension_numbers = #tpu.dot_dimension_numbers<[1], [0], [0], [1], [0, 0, 1, 1], [], []>} : vector<8x32xbf16>, vector<32x32xbf16>, vector<8x32xf32> -> vector<8x32xf32>
    %c0_33 = arith.constant 0 : index
    %c0_34 = arith.constant 0 : index
    %85 = vector.load %arg9[%c0_33, %c0_34] : memref<1x32xf32, #tpu.memory_space<vmem>>, vector<1x32xf32>
    %86 = vector.shape_cast %85 : vector<1x32xf32> to vector<32xf32>
    %87 = vector.shape_cast %86 : vector<32xf32> to vector<1x32xf32>
    %88 = vector.broadcast %87 : vector<1x32xf32> to vector<8x32xf32>
    %89 = arith.addf %84, %88 : vector<8x32xf32>
    %c0_35 = arith.constant 0 : index
    %c0_36 = arith.constant 0 : index
    %c0_37 = arith.constant 0 : index
    %90 = vector.load %arg10[%c0_35, %c0_36, %c0_37] : memref<1x8x32xf32, #tpu.memory_space<vmem>>, vector<1x8x32xf32>
    %91 = vector.shape_cast %90 : vector<1x8x32xf32> to vector<8x32xf32>
    %92 = vector.shape_cast %89 : vector<8x32xf32> to vector<1x8x32xf32>
    tpu.vector_store %arg10[%c0_35, %c0_36, %c0_37], %92 {strides = array<i32>} : memref<1x8x32xf32, #tpu.memory_space<vmem>>, vector<1x8x32xf32>,
    return
  }
  func.func @transform_0(%arg0: i32, %arg1: i32) -> (i32, i32, i32) {
    %c0_i32 = arith.constant 0 : i32
    %c0_i32_0 = arith.constant 0 : i32
    %c0_i32_1 = arith.constant 0 : i32
    return %arg0, %c0_i32, %c0_i32_0 : i32, i32, i32
  }
  func.func @transform_1(%arg0: i32, %arg1: i32) -> (i32, i32, i32) {
    %c0_i32 = arith.constant 0 : i32
    %c0_i32_0 = arith.constant 0 : i32
    return %arg0, %arg1, %c0_i32 : i32, i32, i32
  }
  func.func @transform_2(%arg0: i32, %arg1: i32) -> (i32, i32) {
    %c0_i32 = arith.constant 0 : i32
    %c0_i32_0 = arith.constant 0 : i32
    %c0_i32_1 = arith.constant 0 : i32
    return %c0_i32, %c0_i32_0 : i32, i32
  }
  func.func @transform_3(%arg0: i32, %arg1: i32) -> (i32, i32) {
    %c0_i32 = arith.constant 0 : i32
    %c0_i32_0 = arith.constant 0 : i32
    %c0_i32_1 = arith.constant 0 : i32
    return %c0_i32, %c0_i32_0 : i32, i32
  }
  func.func @transform_4(%arg0: i32, %arg1: i32) -> (i32, i32) {
    %c0_i32 = arith.constant 0 : i32
    %c0_i32_0 = arith.constant 0 : i32
    %c0_i32_1 = arith.constant 0 : i32
    return %c0_i32, %c0_i32_0 : i32, i32
  }
  func.func @transform_5(%arg0: i32, %arg1: i32) -> (i32, i32) {
    %c0_i32 = arith.constant 0 : i32
    %c0_i32_0 = arith.constant 0 : i32
    %c0_i32_1 = arith.constant 0 : i32
    return %c0_i32, %c0_i32_0 : i32, i32
  }
  func.func @transform_6(%arg0: i32, %arg1: i32) -> (i32, i32) {
    %c0_i32 = arith.constant 0 : i32
    %c0_i32_0 = arith.constant 0 : i32
    %c0_i32_1 = arith.constant 0 : i32
    return %c0_i32, %c0_i32_0 : i32, i32
  }
  func.func @transform_7(%arg0: i32, %arg1: i32) -> (i32, i32) {
    %c0_i32 = arith.constant 0 : i32
    %c0_i32_0 = arith.constant 0 : i32
    %c0_i32_1 = arith.constant 0 : i32
    return %c0_i32, %c0_i32_0 : i32, i32
  }
  func.func @transform_8(%arg0: i32, %arg1: i32) -> (i32, i32, i32) {
    %c0_i32 = arith.constant 0 : i32
    %c0_i32_0 = arith.constant 0 : i32
    return %arg0, %arg1, %c0_i32 : i32, i32, i32
  }
}

</mosaic_0001>

<llo_original>
// kernel: tpu_custom_call.1
$region0: #{tpu_custom_call.1}
  #allocation0 [shape = 'u32[]', space=smem, size = 0x4, offset = 0x4, fixed_abs, tag = 'smem constant byte address 0x4 - core index']
  #allocation1 [shape = 'u32[144,128]{1,0:T(1,128)}', space=vmem, size = 0x12000, scoped, tag = 'internal scratch']
  #allocation2 [shape = 'bf16[8,64]{1,0:T(8,128)(2,1)}', space=vmem, size = 0x800, scoped, tag = 'scratch operand']
  #allocation3 [shape = 'bf16[8,32]{1,0:T(8,128)(2,1)}', space=vmem, size = 0x800, scoped, tag = 'scratch operand']
  %s0 = inlined_call_operand.hbm [shape: bf16[2,8,32], index: 0, kind: input, shape index: {}]
  %s1 = inlined_call_operand.hbm [shape: bf16[2,8,32], index: 1, kind: input, shape index: {}]
  %s2 = inlined_call_operand.hbm [shape: bf16[32,32], index: 2, kind: input, shape index: {}]
  %s3 = inlined_call_operand.vmem [shape: f32[1,32], index: 3, kind: input, shape index: {}]
  %s4 = inlined_call_operand.hbm [shape: bf16[32,64], index: 4, kind: input, shape index: {}]
  %s5 = inlined_call_operand.vmem [shape: f32[1,64], index: 5, kind: input, shape index: {}]
  %s6 = inlined_call_operand.vmem [shape: bf16[32,32], index: 6, kind: input, shape index: {}]
  %s7 = inlined_call_operand.vmem [shape: f32[1,32], index: 7, kind: input, shape index: {}]
  %s8 = inlined_call_operand.hbm [shape: f32[2,8,32], index: 8, kind: output, shape index: {}]
  %s9 = sld [smem:[#allocation0]]
  $region85: #{tpu_custom_call.1} parent=0
    _
  %s11 = ssub.s32 1, %s9
  %s12 = scalar_select 0, %s11, %s9
  $region1: #{tpu_custom_call.1} parent=0
    #allocation4 [shape = 'u8[4096]{0}', space=vmem, size = 0x1000, scoped, tag = 'input window, operand 0']
    #allocation5 [shape = 's32[2]{0}', space=sflag, size = 0x8, scoped, tag = 'scoped memory for tpu_custom_call.1']
    #allocation6 [shape = 's32[2]{0}', space=sflag, size = 0x8, scoped, tag = 'scoped memory for tpu_custom_call.1']
    #allocation7 [shape = 'u8[4096]{0}', space=vmem, size = 0x1000, scoped, tag = 'input window, operand 1']
    #allocation8 [shape = 's32[2]{0}', space=sflag, size = 0x8, scoped, tag = 'scoped memory for tpu_custom_call.1']
    #allocation9 [shape = 'u8[8192]{0}', space=vmem, size = 0x2000, scoped, tag = 'input window, operand 2, single buffered']
    #allocation10 [shape = 'u8[8192]{0}', space=vmem, size = 0x2000, scoped, tag = 'input window, operand 4, single buffered']
    #allocation11 [shape = 's32[1]{0}', space=sflag, size = 0x4, scoped, tag = 'scoped memory for tpu_custom_call.1']
    #allocation12 [shape = 'u8[8192]{0}', space=vmem, size = 0x2000, scoped, tag = 'output window, operand 0']
    %13 = vsyncpa [#allocation5], 0
    %s14 = scalar_lea.sflag [#allocation5], 1
    %15 = vsyncpa %s14, 0
    %16 = vsyncpa [#allocation8], 0
    %s17 = scalar_lea.sflag [#allocation8], 1
    %18 = vsyncpa %s17, 0
    %19 = vsyncpa [#allocation11], 0
    %20 = vsyncpa [#allocation6], 0
    %s21 = scalar_lea.sflag [#allocation6], 1
    %22 = vsyncpa %s21, 0
    loop: start=0, step=1, limit=4
    $region2: #{tpu_custom_call.1} parent=1 // loop_pre_header
      _
    $region3: #{tpu_custom_call.1} parent=1 // loop_header
      %s24 = sphi 0, %s28
      %p25 = scmp.ge.s32.totalorder %s24, 4
      %s31 = sphi 0, %s43
      %s32 = sphi 0, %s39
      %s33 = sphi 0, %s31
      %s34 = sphi 0, %s32
      %s35 = sphi 0, %s33
      %s36 = sphi 0, %s34
      %s46 = sphi 0, %s48
      %s49 = sphi 0, %s46
      %s50 = sphi 0, %s49
      %s66 = sphi 0, %s50
      %s74 = sphi 0, %s76
      %s77 = sphi 0, %s74
      %s78 = sphi 0, %s77
      %s94 = sphi 0, %s78
      %s98 = sphi 0, %s98
      %s100 = sphi 0, %s98
      %s101 = sphi 0, %s100
      %s115 = sphi 0, %s101
      %s119 = sphi 0, %s119
      %s121 = sphi 0, %s119
      %s122 = sphi 0, %s121
      %s136 = sphi 0, %s122
      %s140 = sphi 0, %s140
      %s142 = sphi 0, %s140
      %s143 = sphi 0, %s142
      %s157 = sphi 0, %s143
      %s161 = sphi 0, %s161
      %s163 = sphi 0, %s161
      %s164 = sphi 0, %s163
      %s178 = sphi 0, %s164
      %s182 = sphi 0, %s182
      %s184 = sphi 0, %s182
      %s185 = sphi 0, %s184
      %s199 = sphi 0, %s185
      %s203 = sphi 0, %s203
      %s205 = sphi 0, %s203
      %s206 = sphi 0, %s205
      %s220 = sphi 0, %s206
      %s228 = sphi 0, %s230
      %s231 = sphi 0, %s228
      %s232 = sphi 0, %s231
      %s248 = sphi 0, %s232
    $region4: #{tpu_custom_call.1} parent=1 // loop_header_branch
      %27 = sbr.rel (%p25) target = $region8
    $region5: #{tpu_custom_call.1} parent=1 // loop_body
      %s29 = ssub.s32 %s24, 1
      %s30 = ssub.s32 %s24, 2
      %s37 = sadd.s32 1, %s32
      %p38 = scmp.ge.s32.totalorder %s37, 1
      %s39 = scalar_select %p38, 0, %s37
      %s40 = sadd.s32 1, %s31
      %s41 = scalar_select %p38, %s40, %s31
      %p42 = scmp.ge.s32.totalorder %s41, 2
      %s43 = scalar_select %p42, 0, %s41
      %s44 = ssub.s32 %s31, %s43
      %p45 = scmp.eq.s32.totalorder %s44, 0
      %s47 = sadd.s32 %s46, 1
      %s48 = scalar_select %p45, %s46, %s47
      %p51 = pneg %p45
      %p52 = scmp.eq.s32.totalorder %s24, 1
      %p53 = por %p51, %p52
      %p54 = scmp.ne.s32.totalorder %s46, %s49
      %p55 = scmp.eq.s32.totalorder %s24, 0
      %p56 = por %p54, %p55
      %p57 = scmp.ne.s32.totalorder %s46, %s49
      %p58 = scmp.eq.s32.totalorder %s29, 1
      %p59 = por %p57, %p58
      %p60 = scmp.ne.s32.totalorder %s49, %s50
      %p61 = scmp.eq.s32.totalorder %s29, 0
      %p62 = por %p60, %p61
      %p63 = scmp.ne.s32.totalorder %s49, %s50
      %p64 = scmp.eq.s32.totalorder %s30, 1
      %p65 = por %p63, %p64
      %p67 = scmp.ne.s32.totalorder %s50, %s66
      %p68 = scmp.eq.s32.totalorder %s30, 0
      %p69 = por %p67, %p68
      %s70 = ssub.s32 %s31, %s43
      %s71 = ssub.s32 %s32, %s39
      %s72 = sor.u32 %s70, %s71
      %p73 = scmp.eq.s32.totalorder %s72, 0
      %s75 = sadd.s32 %s74, 1
      %s76 = scalar_select %p73, %s74, %s75
      %p79 = pneg %p73
      %p80 = scmp.eq.s32.totalorder %s24, 1
      %p81 = por %p79, %p80
      %p82 = scmp.ne.s32.totalorder %s74, %s77
      %p83 = scmp.eq.s32.totalorder %s24, 0
      %p84 = por %p82, %p83
      %p85 = scmp.ne.s32.totalorder %s74, %s77
      %p86 = scmp.eq.s32.totalorder %s29, 1
      %p87 = por %p85, %p86
      %p88 = scmp.ne.s32.totalorder %s77, %s78
      %p89 = scmp.eq.s32.totalorder %s29, 0
      %p90 = por %p88, %p89
      %p91 = scmp.ne.s32.totalorder %s77, %s78
      %p92 = scmp.eq.s32.totalorder %s30, 1
      %p93 = por %p91, %p92
      %p95 = scmp.ne.s32.totalorder %s78, %s94
      %p96 = scmp.eq.s32.totalorder %s30, 0
      %p97 = por %p95, %p96
      %s99 = sadd.s32 %s98, 1
      %p102 = scmp.eq.s32.totalorder %s24, 1
      %p103 = scmp.ne.s32.totalorder %s98, %s100
      %p104 = scmp.eq.s32.totalorder %s24, 0
      %p105 = por %p103, %p104
      %p106 = scmp.ne.s32.totalorder %s98, %s100
      %p107 = scmp.eq.s32.totalorder %s29, 1
      %p108 = por %p106, %p107
      %p109 = scmp.ne.s32.totalorder %s100, %s101
      %p110 = scmp.eq.s32.totalorder %s29, 0
      %p111 = por %p109, %p110
      %p112 = scmp.ne.s32.totalorder %s100, %s101
      %p113 = scmp.eq.s32.totalorder %s30, 1
      %p114 = por %p112, %p113
      %p116 = scmp.ne.s32.totalorder %s101, %s115
      %p117 = scmp.eq.s32.totalorder %s30, 0
      %p118 = por %p116, %p117
      %s120 = sadd.s32 %s119, 1
      %p123 = scmp.eq.s32.totalorder %s24, 1
      %p124 = scmp.ne.s32.totalorder %s119, %s121
      %p125 = scmp.eq.s32.totalorder %s24, 0
      %p126 = por %p124, %p125
      %p127 = scmp.ne.s32.totalorder %s119, %s121
      %p128 = scmp.eq.s32.totalorder %s29, 1
      %p129 = por %p127, %p128
      %p130 = scmp.ne.s32.totalorder %s121, %s122
      %p131 = scmp.eq.s32.totalorder %s29, 0
      %p132 = por %p130, %p131
      %p133 = scmp.ne.s32.totalorder %s121, %s122
      %p134 = scmp.eq.s32.totalorder %s30, 1
      %p135 = por %p133, %p134
      %p137 = scmp.ne.s32.totalorder %s122, %s136
      %p138 = scmp.eq.s32.totalorder %s30, 0
      %p139 = por %p137, %p138
      %s141 = sadd.s32 %s140, 1
      %p144 = scmp.eq.s32.totalorder %s24, 1
      %p145 = scmp.ne.s32.totalorder %s140, %s142
      %p146 = scmp.eq.s32.totalorder %s24, 0
      %p147 = por %p145, %p146
      %p148 = scmp.ne.s32.totalorder %s140, %s142
      %p149 = scmp.eq.s32.totalorder %s29, 1
      %p150 = por %p148, %p149
      %p151 = scmp.ne.s32.totalorder %s142, %s143
      %p152 = scmp.eq.s32.totalorder %s29, 0
      %p153 = por %p151, %p152
      %p154 = scmp.ne.s32.totalorder %s142, %s143
      %p155 = scmp.eq.s32.totalorder %s30, 1
      %p156 = por %p154, %p155
      %p158 = scmp.ne.s32.totalorder %s143, %s157
      %p159 = scmp.eq.s32.totalorder %s30, 0
      %p160 = por %p158, %p159
      %s162 = sadd.s32 %s161, 1
      %p165 = scmp.eq.s32.totalorder %s24, 1
      %p166 = scmp.ne.s32.totalorder %s161, %s163
      %p167 = scmp.eq.s32.totalorder %s24, 0
      %p168 = por %p166, %p167
      %p169 = scmp.ne.s32.totalorder %s161, %s163
      %p170 = scmp.eq.s32.totalorder %s29, 1
      %p171 = por %p169, %p170
      %p172 = scmp.ne.s32.totalorder %s163, %s164
      %p173 = scmp.eq.s32.totalorder %s29, 0
      %p174 = por %p172, %p173
      %p175 = scmp.ne.s32.totalorder %s163, %s164
      %p176 = scmp.eq.s32.totalorder %s30, 1
      %p177 = por %p175, %p176
      %p179 = scmp.ne.s32.totalorder %s164, %s178
      %p180 = scmp.eq.s32.totalorder %s30, 0
      %p181 = por %p179, %p180
      %s183 = sadd.s32 %s182, 1
      %p186 = scmp.eq.s32.totalorder %s24, 1
      %p187 = scmp.ne.s32.totalorder %s182, %s184
      %p188 = scmp.eq.s32.totalorder %s24, 0
      %p189 = por %p187, %p188
      %p190 = scmp.ne.s32.totalorder %s182, %s184
      %p191 = scmp.eq.s32.totalorder %s29, 1
      %p192 = por %p190, %p191
      %p193 = scmp.ne.s32.totalorder %s184, %s185
      %p194 = scmp.eq.s32.totalorder %s29, 0
      %p195 = por %p193, %p194
      %p196 = scmp.ne.s32.totalorder %s184, %s185
      %p197 = scmp.eq.s32.totalorder %s30, 1
      %p198 = por %p196, %p197
      %p200 = scmp.ne.s32.totalorder %s185, %s199
      %p201 = scmp.eq.s32.totalorder %s30, 0
      %p202 = por %p200, %p201
      %s204 = sadd.s32 %s203, 1
      %p207 = scmp.eq.s32.totalorder %s24, 1
      %p208 = scmp.ne.s32.totalorder %s203, %s205
      %p209 = scmp.eq.s32.totalorder %s24, 0
      %p210 = por %p208, %p209
      %p211 = scmp.ne.s32.totalorder %s203, %s205
      %p212 = scmp.eq.s32.totalorder %s29, 1
      %p213 = por %p211, %p212
      %p214 = scmp.ne.s32.totalorder %s205, %s206
      %p215 = scmp.eq.s32.totalorder %s29, 0
      %p216 = por %p214, %p215
      %p217 = scmp.ne.s32.totalorder %s205, %s206
      %p218 = scmp.eq.s32.totalorder %s30, 1
      %p219 = por %p217, %p218
      %p221 = scmp.ne.s32.totalorder %s206, %s220
      %p222 = scmp.eq.s32.totalorder %s30, 0
      %p223 = por %p221, %p222
      %s224 = ssub.s32 %s31, %s43
      %s225 = ssub.s32 %s32, %s39
      %s226 = sor.u32 %s224, %s225
      %p227 = scmp.eq.s32.totalorder %s226, 0
      %s229 = sadd.s32 %s228, 1
      %s230 = scalar_select %p227, %s228, %s229
      %p233 = pneg %p227
      %p234 = scmp.eq.s32.totalorder %s24, 1
      %p235 = por %p233, %p234
      %p236 = scmp.ne.s32.totalorder %s228, %s231
      %p237 = scmp.eq.s32.totalorder %s24, 0
      %p238 = por %p236, %p237
      %p239 = scmp.ne.s32.totalorder %s228, %s231
      %p240 = scmp.eq.s32.totalorder %s29, 1
      %p241 = por %p239, %p240
      %p242 = scmp.ne.s32.totalorder %s231, %s232
      %p243 = scmp.eq.s32.totalorder %s29, 0
      %p244 = por %p242, %p243
      %p245 = scmp.ne.s32.totalorder %s231, %s232
      %p246 = scmp.eq.s32.totalorder %s30, 1
      %p247 = por %p245, %p246
      %p249 = scmp.ne.s32.totalorder %s232, %s248
      %p250 = scmp.eq.s32.totalorder %s30, 0
      %p251 = por %p249, %p250
      %p252 = scmp.le.s32.totalorder 1, %s24
      %p253 = scmp.lt.s32.totalorder %s24, 3
      %p254 = pnand %p252, %p253
      %p255 = pneg %p254
      // Predicated region
      $region9: #{tpu_custom_call.1} parent=5 // pred_check
        _
      $region10: #{tpu_custom_call.1} parent=5 // pred_check_branch
        %257 = sbr.rel (%p254) target = $region12
      $region11: #{tpu_custom_call.1} parent=5 // pred_region
        %s258 = ssub.s32 %s24, 1
        // Predicated region
        $region13: #{tpu_custom_call.1} parent=11 // pred_check
          %p259 = pneg %p111
        $region14: #{tpu_custom_call.1} parent=11 // pred_check_branch
          %261 = sbr.rel (%p259) target = $region16
        $region15: #{tpu_custom_call.1} parent=11 // pred_region
          %s263 = ssub.s32 256, 256
          %264 = vsyncadd [#allocation8], %s263
          %s265 = sshll.u32 [#allocation9], 4
          %s266 = int_to_ptr.vmem [resolvable:$true] %s265
          %271 = dma.hbm_to_vmem [thread:$0]  %s2, 256, %s266, [#allocation8], 64, 64, 4
        $region16: #{tpu_custom_call.1} parent=11 // pred_fallthru
          _
        // Predicated region
        $region17: #{tpu_custom_call.1} parent=11 // pred_check
          %p272 = pneg %p132
        $region18: #{tpu_custom_call.1} parent=11 // pred_check_branch
          %274 = sbr.rel (%p272) target = $region20
        $region19: #{tpu_custom_call.1} parent=11 // pred_region
          _
        $region20: #{tpu_custom_call.1} parent=11 // pred_fallthru
          _
        // Predicated region
        $region21: #{tpu_custom_call.1} parent=11 // pred_check
          %p275 = pneg %p153
        $region22: #{tpu_custom_call.1} parent=11 // pred_check_branch
          %277 = sbr.rel (%p275) target = $region24
        $region23: #{tpu_custom_call.1} parent=11 // pred_region
          %s279 = ssub.s32 256, 256
          %280 = vsyncadd [#allocation11], %s279
          %s281 = sshll.u32 [#allocation10], 4
          %s282 = int_to_ptr.vmem [resolvable:$true] %s281
          %287 = dma.hbm_to_vmem [thread:$0]  %s4, 256, %s282, [#allocation11], 64, 64, 4
        $region24: #{tpu_custom_call.1} parent=11 // pred_fallthru
          _
        // Predicated region
        $region25: #{tpu_custom_call.1} parent=11 // pred_check
          %p288 = pneg %p174
        $region26: #{tpu_custom_call.1} parent=11 // pred_check_branch
          %290 = sbr.rel (%p288) target = $region28
        $region27: #{tpu_custom_call.1} parent=11 // pred_region
          _
        $region28: #{tpu_custom_call.1} parent=11 // pred_fallthru
          _
        // Predicated region
        $region29: #{tpu_custom_call.1} parent=11 // pred_check
          %p291 = pneg %p195
        $region30: #{tpu_custom_call.1} parent=11 // pred_check_branch
          %293 = sbr.rel (%p291) target = $region32
        $region31: #{tpu_custom_call.1} parent=11 // pred_region
          _
        $region32: #{tpu_custom_call.1} parent=11 // pred_fallthru
          _
        // Predicated region
        $region33: #{tpu_custom_call.1} parent=11 // pred_check
          %p294 = pneg %p216
        $region34: #{tpu_custom_call.1} parent=11 // pred_check_branch
          %296 = sbr.rel (%p294) target = $region36
        $region35: #{tpu_custom_call.1} parent=11 // pred_region
          _
        $region36: #{tpu_custom_call.1} parent=11 // pred_fallthru
          _
      $region12: #{tpu_custom_call.1} parent=5 // pred_fallthru
        _
      %p297 = scmp.lt.s32.totalorder %s24, 2
      // Predicated region
      $region37: #{tpu_custom_call.1} parent=5 // pred_check
        %p298 = pneg %p297
      $region38: #{tpu_custom_call.1} parent=5 // pred_check_branch
        %300 = sbr.rel (%p298) target = $region40
      $region39: #{tpu_custom_call.1} parent=5 // pred_region
        // Predicated region
        $region41: #{tpu_custom_call.1} parent=39 // pred_check
          %p301 = pneg %p56
        $region42: #{tpu_custom_call.1} parent=39 // pred_check_branch
          %303 = sbr.rel (%p301) target = $region44
        $region43: #{tpu_custom_call.1} parent=39 // pred_region
          %s304 = sand.u32 %s46, 1
          %s305 = scalar_lea.sflag [#allocation5], %s304
          %s306 = sand.u32 %s46, 1
          %s307 = smul.addr %s306, 4
          %s308 = scalar_lea.vmem [#allocation4], %s307
          %s310 = ssub.s32 64, 64
          %311 = vsyncadd %s305, %s310
          %s312 = smul.addr %s31, 64
          %s313 = scalar_lea.hbm %s0, %s312
          %s315 = sshll.u32 %s308, 4
          %s316 = int_to_ptr.vmem [resolvable:$true] %s315
          %318 = dma.hbm_to_vmem [thread:$0]  %s313, 64, %s316, %s305
        $region44: #{tpu_custom_call.1} parent=39 // pred_fallthru
          _
        // Predicated region
        $region45: #{tpu_custom_call.1} parent=39 // pred_check
          %p319 = pneg %p84
        $region46: #{tpu_custom_call.1} parent=39 // pred_check_branch
          %321 = sbr.rel (%p319) target = $region48
        $region47: #{tpu_custom_call.1} parent=39 // pred_region
          %s322 = sand.u32 %s24, 1
          %s323 = scalar_lea.sflag [#allocation8], %s322
          %s324 = sand.u32 %s74, 1
          %s325 = smul.addr %s324, 4
          %s326 = scalar_lea.vmem [#allocation7], %s325
          %s328 = ssub.s32 64, 64
          %329 = vsyncadd %s323, %s328
          %s330 = sadd.s32 %s32, %s31
          %s331 = smul.addr %s330, 64
          %s332 = scalar_lea.hbm %s1, %s331
          %s334 = sshll.u32 %s326, 4
          %s335 = int_to_ptr.vmem [resolvable:$true] %s334
          %337 = dma.hbm_to_vmem [thread:$0]  %s332, 64, %s335, %s323
        $region48: #{tpu_custom_call.1} parent=39 // pred_fallthru
          _
      $region40: #{tpu_custom_call.1} parent=5 // pred_fallthru
        _
      %p338 = scmp.le.s32.totalorder 1, %s24
      %p339 = scmp.lt.s32.totalorder %s24, 3
      %p340 = pnand %p338, %p339
      %p341 = pneg %p340
      // Predicated region
      $region49: #{tpu_custom_call.1} parent=5 // pred_check
        _
      $region50: #{tpu_custom_call.1} parent=5 // pred_check_branch
        %343 = sbr.rel (%p340) target = $region52
      $region51: #{tpu_custom_call.1} parent=5 // pred_region
        %s344 = ssub.s32 %s24, 1
        %s345 = sand.u32 %s49, 1
        %s346 = scalar_lea.sflag [#allocation5], %s345
        %s347 = sand.u32 %s49, 1
        %s348 = smul.addr %s347, 4
        %s349 = scalar_lea.vmem [#allocation4], %s348
        // Predicated region
        $region53: #{tpu_custom_call.1} parent=51 // pred_check
          %p350 = pneg %p62
        $region54: #{tpu_custom_call.1} parent=51 // pred_check_branch
          %352 = sbr.rel (%p350) target = $region56
        $region55: #{tpu_custom_call.1} parent=51 // pred_region
          %353 = dma.done %s346, 64
        $region56: #{tpu_custom_call.1} parent=51 // pred_fallthru
          _
        %s354 = sand.u32 %s29, 1
        %s355 = scalar_lea.sflag [#allocation8], %s354
        %s356 = sand.u32 %s77, 1
        %s357 = smul.addr %s356, 4
        %s358 = scalar_lea.vmem [#allocation7], %s357
        // Predicated region
        $region57: #{tpu_custom_call.1} parent=51 // pred_check
          %p359 = pneg %p90
        $region58: #{tpu_custom_call.1} parent=51 // pred_check_branch
          %361 = sbr.rel (%p359) target = $region60
        $region59: #{tpu_custom_call.1} parent=51 // pred_region
          %362 = dma.done %s355, 64
        $region60: #{tpu_custom_call.1} parent=51 // pred_fallthru
          _
        // Predicated region
        $region61: #{tpu_custom_call.1} parent=51 // pred_check
          %p363 = pneg %p111
        $region62: #{tpu_custom_call.1} parent=51 // pred_check_branch
          %365 = sbr.rel (%p363) target = $region64
        $region63: #{tpu_custom_call.1} parent=51 // pred_region
          %366 = dma.done [#allocation8], 256
        $region64: #{tpu_custom_call.1} parent=51 // pred_fallthru
          _
        // Predicated region
        $region65: #{tpu_custom_call.1} parent=51 // pred_check
          %p367 = pneg %p153
        $region66: #{tpu_custom_call.1} parent=51 // pred_check_branch
          %369 = sbr.rel (%p367) target = $region68
        $region67: #{tpu_custom_call.1} parent=51 // pred_region
          %370 = dma.done [#allocation11], 256
        $region68: #{tpu_custom_call.1} parent=51 // pred_fallthru
          _
        %s371 = sand.u32 %s49, 1
        %s372 = scalar_lea.sflag [#allocation5], %s371
        %s373 = sand.u32 %s49, 1
        %s374 = smul.addr %s373, 4
        %s375 = scalar_lea.vmem [#allocation4], %s374
        %p376 = pneg %p62
        %p377 = pneg %p59
        %s378 = sand.u32 %s29, 1
        %s379 = scalar_lea.sflag [#allocation8], %s378
        %s380 = sand.u32 %s77, 1
        %s381 = smul.addr %s380, 4
        %s382 = scalar_lea.vmem [#allocation7], %s381
        %p383 = pneg %p90
        %p384 = pneg %p87
        %p385 = pneg %p111
        %p386 = pneg %p108
        %p387 = pneg %p132
        %p388 = pneg %p129
        %p389 = pneg %p153
        %p390 = pneg %p150
        %p391 = pneg %p174
        %p392 = pneg %p171
        %p393 = pneg %p195
        %p394 = pneg %p192
        %p395 = pneg %p216
        %p396 = pneg %p213
        %p397 = pneg %p244
        %p398 = pneg %p241
        %s399 = sand.u32 %s231, 1
        %s400 = scalar_lea.sflag [#allocation6], %s399
        %s401 = sand.u32 %s231, 1
        %s402 = smul.addr %s401, 8
        %s403 = scalar_lea.vmem [#allocation12], %s402
        %p405 = scmp.eq.s32.totalorder %s34, 0
        // Predicated region
        $region69: #{tpu_custom_call.1} parent=51 // pred_check
          %p406 = pneg %p405
        $region70: #{tpu_custom_call.1} parent=51 // pred_check_branch
          %408 = sbr.rel (%p406) target = $region72
        $region71: #{tpu_custom_call.1} parent=51 // pred_region
          %v409 = vld [vmem:[%s349] sm:$0xf]
          %v410 = vld [vmem:[#allocation10] sm:$0xf]
          %v411 = vld [vmem:[#allocation10 + $0x4] sm:$0xf]
          %v412 = vld [vmem:[#allocation10 + $0x8] sm:$0xf]
          %v413 = vld [vmem:[#allocation10 + $0xc] sm:$0xf]
          %v414 = vld [vmem:[%s5] sm:$0x1]
          %v416 = vlaneseq
          %v417 = vshrl.u32 %v416, 7
          %v418 = vsub.s32 0, %v417
          %v419 = vrot.slane %v414, %v418
          %v425 = vunpack.c.l.b16 %v410
          %v426 = vunpack.c.l.b16 %v411
          %v427 = vunpack.c.l.b16 %v412
          %v428 = vunpack.c.l.b16 %v413
          %v429 = vpack.c.b16 %v426, %v425
          %v430 = vpack.c.b16 %v428, %v427
          %vm433 = vcmask 261120
          %v435 = vsel %vm433, %v409, 0
          %437 = vmatprep.subr.bf16.mxu0 0
          %438 = vmatpush1.bf16.msra.mxu0 %v429
          %439 = vmatprep.subr.bf16.mxu0 0
          %440 = vmatpush1.bf16.msra.mxu0 %v430
          %441 = vmatprep.subr.bf16.mxu0 0
          %442 = vmatpush1.bf16.msra.mxu0 0
          %443 = vmatprep.subr.bf16.mxu0 0
          %444 = vmatpush1.bf16.msra.mxu0 0
          %445 = vmatprep.subr.bf16.mxu0 0
          %446 = vmatpush1.bf16.msra.mxu0 0
          %447 = vmatprep.subr.bf16.mxu0 0
          %448 = vmatpush1.bf16.msra.mxu0 0
          %449 = vmatprep.subr.bf16.mxu0 0
          %450 = vmatpush1.bf16.msra.mxu0 0
          %451 = vmatprep.subr.bf16.mxu0 0
          %452 = vmatpush1.bf16.msra.mxu0 0
          %453 = vmatprep.subr.bf16.mxu0 0
          %454 = vmatpush1.bf16.msra.mxu0 0
          %455 = vmatprep.subr.bf16.mxu0 0
          %456 = vmatpush1.bf16.msra.mxu0 0
          %457 = vmatprep.subr.bf16.mxu0 0
          %458 = vmatpush1.bf16.msra.mxu0 0
          %459 = vmatprep.subr.bf16.mxu0 0
          %460 = vmatpush1.bf16.msra.mxu0 0
          %461 = vmatprep.subr.bf16.mxu0 0
          %462 = vmatpush1.bf16.msra.mxu0 0
          %463 = vmatprep.subr.bf16.mxu0 0
          %464 = vmatpush1.bf16.msra.mxu0 0
          %465 = vmatprep.subr.bf16.mxu0 0
          %466 = vmatpush1.bf16.msra.mxu0 0
          %467 = vmatprep.subr.bf16.mxu0 0
          %468 = vmatpush1.bf16.msra.mxu0 0
          %469 = vmatprep.mubr.bf16.mxu0 0
          %470 = vmatmul.mubr.bf16.gmra.mrb[0].mxu0 %v435
          %v471 = vpop.f32.mrb[0].mxu0
          %v472 = vadd.f32 %v419, %v471
          %v473 = vpop.f32.mrb[0].mxu0
          %v474 = vpop.f32.mrb[0].mxu0
          %v475 = vpop.f32.mrb[0].mxu0
          %476 = vdwg.mxu0
          %v477 = vpack.c.bf16 %v472, %v472
          %vm478 = vcmask 519168
          %479 = vst.msk [vmem:[#allocation2] sm:$0xf] %vm478, %v477
        $region72: #{tpu_custom_call.1} parent=51 // pred_fallthru
          _
        %v480 = vld [vmem:[%s358] sm:$0xf]
        %v481 = vld [vmem:[#allocation9] sm:$0xf]
        %v482 = vld [vmem:[#allocation9 + $0x4] sm:$0xf]
        %v483 = vld [vmem:[#allocation9 + $0x8] sm:$0xf]
        %v484 = vld [vmem:[#allocation9 + $0xc] sm:$0xf]
        %v485 = vld [vmem:[%s3] sm:$0x1]
        %v487 = vlaneseq
        %v488 = vshrl.u32 %v487, 7
        %v489 = vsub.s32 0, %v488
        %v490 = vrot.slane %v485, %v489
        %v496 = vunpack.c.l.b16 %v481
        %v497 = vunpack.c.l.b16 %v482
        %v498 = vunpack.c.l.b16 %v483
        %v499 = vunpack.c.l.b16 %v484
        %v500 = vpack.c.b16 %v497, %v496
        %v501 = vpack.c.b16 %v499, %v498
        %vm504 = vcmask 261120
        %v506 = vsel %vm504, %v480, 0
        %508 = vmatprep.subr.bf16.mxu0 0
        %509 = vmatpush1.bf16.msra.mxu0 %v500
        %510 = vmatprep.subr.bf16.mxu0 0
        %511 = vmatpush1.bf16.msra.mxu0 %v501
        %512 = vmatprep.subr.bf16.mxu0 0
        %513 = vmatpush1.bf16.msra.mxu0 0
        %514 = vmatprep.subr.bf16.mxu0 0
        %515 = vmatpush1.bf16.msra.mxu0 0
        %516 = vmatprep.subr.bf16.mxu0 0
        %517 = vmatpush1.bf16.msra.mxu0 0
        %518 = vmatprep.subr.bf16.mxu0 0
        %519 = vmatpush1.bf16.msra.mxu0 0
        %520 = vmatprep.subr.bf16.mxu0 0
        %521 = vmatpush1.bf16.msra.mxu0 0
        %522 = vmatprep.subr.bf16.mxu0 0
        %523 = vmatpush1.bf16.msra.mxu0 0
        %524 = vmatprep.subr.bf16.mxu0 0
        %525 = vmatpush1.bf16.msra.mxu0 0
        %526 = vmatprep.subr.bf16.mxu0 0
        %527 = vmatpush1.bf16.msra.mxu0 0
        %528 = vmatprep.subr.bf16.mxu0 0
        %529 = vmatpush1.bf16.msra.mxu0 0
        %530 = vmatprep.subr.bf16.mxu0 0
        %531 = vmatpush1.bf16.msra.mxu0 0
        %532 = vmatprep.subr.bf16.mxu0 0
        %533 = vmatpush1.bf16.msra.mxu0 0
        %534 = vmatprep.subr.bf16.mxu0 0
        %535 = vmatpush1.bf16.msra.mxu0 0
        %536 = vmatprep.subr.bf16.mxu0 0
        %537 = vmatpush1.bf16.msra.mxu0 0
        %538 = vmatprep.subr.bf16.mxu0 0
        %539 = vmatpush1.bf16.msra.mxu0 0
        %540 = vmatprep.mubr.bf16.mxu0 0
        %541 = vmatmul.mubr.bf16.gmra.mrb[0].mxu0 %v506
        %v542 = vpop.f32.mrb[0].mxu0
        %v543 = vadd.f32 %v490, %v542
        %v544 = vpop.f32.mrb[0].mxu0
        %v545 = vpop.f32.mrb[0].mxu0
        %v546 = vpop.f32.mrb[0].mxu0
        %547 = vdwg.mxu0
        %v548 = vpack.c.bf16 %v543, %v543
        %v549 = vld [vmem:[#allocation2] sm:$0xf]
        %vm550 = vcmask 64512
        %v552 = vsel %vm550, %v548, 0
        %v555 = vsel %vm550, %v549, 0
        %557 = vmatprep.subr.bf16.mxu0 0
        %558 = vmatpush1.bf16.xpose.msra.mxu0 %v555
        %559 = vmatprep.subr.bf16.mxu0 0
        %560 = vmatpush1.bf16.xpose.msra.mxu0 0
        %561 = vmatprep.subr.bf16.mxu0 0
        %562 = vmatpush1.bf16.xpose.msra.mxu0 0
        %563 = vmatprep.subr.bf16.mxu0 0
        %564 = vmatpush1.bf16.xpose.msra.mxu0 0
        %565 = vmatprep.subr.bf16.mxu0 0
        %566 = vmatpush1.bf16.xpose.msra.mxu0 0
        %567 = vmatprep.subr.bf16.mxu0 0
        %568 = vmatpush1.bf16.xpose.msra.mxu0 0
        %569 = vmatprep.subr.bf16.mxu0 0
        %570 = vmatpush1.bf16.xpose.msra.mxu0 0
        %571 = vmatprep.subr.bf16.mxu0 0
        %572 = vmatpush1.bf16.xpose.msra.mxu0 0
        %573 = vmatprep.subr.bf16.mxu0 0
        %574 = vmatpush1.bf16.xpose.msra.mxu0 0
        %575 = vmatprep.subr.bf16.mxu0 0
        %576 = vmatpush1.bf16.xpose.msra.mxu0 0
        %577 = vmatprep.subr.bf16.mxu0 0
        %578 = vmatpush1.bf16.xpose.msra.mxu0 0
        %579 = vmatprep.subr.bf16.mxu0 0
        %580 = vmatpush1.bf16.xpose.msra.mxu0 0
        %581 = vmatprep.subr.bf16.mxu0 0
        %582 = vmatpush1.bf16.xpose.msra.mxu0 0
        %583 = vmatprep.subr.bf16.mxu0 0
        %584 = vmatpush1.bf16.xpose.msra.mxu0 0
        %585 = vmatprep.subr.bf16.mxu0 0
        %586 = vmatpush1.bf16.xpose.msra.mxu0 0
        %587 = vmatprep.subr.bf16.mxu0 0
        %588 = vmatpush1.bf16.xpose.msra.mxu0 0
        %589 = vmatprep.mubr.bf16.mxu0 0
        %590 = vmatmul.mubr.bf16.gmra.mrb[0].mxu0 %v552
        %v591 = vpop.f32.mrb[0].mxu0
        %v592 = vadd.f32 0.0, %v591
        %v593 = vpop.f32.mrb[0].mxu0
        %v594 = vpop.f32.mrb[0].mxu0
        %v595 = vpop.f32.mrb[0].mxu0
        %596 = vdwg.mxu0
        %v597 = vsel %vm550, %v592, -inf
        %598 = vmax.xlane.f32.xlu0 %v597
        %v599 = vpop.xlane.xlu0 %598
        %v600 = vsub.f32 %v592, %v599
        %v601 = vmul.f32 %v600, 1.442695
        %v602 = vpow.pop %v601
        %v603 = vsel %vm550, %v602, 0.0
        %604 = vadd.xlane.f32.xlu0 %v603
        %v605 = vpop.xlane.xlu0 %604
        %v606 = vrcp.pop %v605
        %v607 = vmul.f32 %v602, %v606
        %v608 = vpack.c.bf16 %v607, %v607
        %v610 = vunpack.c.l.b16 %v549
        %v611 = vpack.c.b16 %v610, %v610
        %612 = vrot.lane.b32.xlu0 %v611, 96
        %v613 = vpop.permute.xlu0 %612
        %v615 = vsel %vm550, %v608, 0
        %vm617 = vcmask 1043456
        %v619 = vsel %vm617, %v613, 0
        %621 = vmatprep.subr.bf16.mxu0 0
        %622 = vmatpush1.bf16.msra.mxu0 %v619
        %623 = vmatprep.subr.bf16.mxu0 0
        %624 = vmatpush1.bf16.msra.mxu0 0
        %625 = vmatprep.subr.bf16.mxu0 0
        %626 = vmatpush1.bf16.msra.mxu0 0
        %627 = vmatprep.subr.bf16.mxu0 0
        %628 = vmatpush1.bf16.msra.mxu0 0
        %629 = vmatprep.subr.bf16.mxu0 0
        %630 = vmatpush1.bf16.msra.mxu0 0
        %631 = vmatprep.subr.bf16.mxu0 0
        %632 = vmatpush1.bf16.msra.mxu0 0
        %633 = vmatprep.subr.bf16.mxu0 0
        %634 = vmatpush1.bf16.msra.mxu0 0
        %635 = vmatprep.subr.bf16.mxu0 0
        %636 = vmatpush1.bf16.msra.mxu0 0
        %637 = vmatprep.subr.bf16.mxu0 0
        %638 = vmatpush1.bf16.msra.mxu0 0
        %639 = vmatprep.subr.bf16.mxu0 0
        %640 = vmatpush1.bf16.msra.mxu0 0
        %641 = vmatprep.subr.bf16.mxu0 0
        %642 = vmatpush1.bf16.msra.mxu0 0
        %643 = vmatprep.subr.bf16.mxu0 0
        %644 = vmatpush1.bf16.msra.mxu0 0
        %645 = vmatprep.subr.bf16.mxu0 0
        %646 = vmatpush1.bf16.msra.mxu0 0
        %647 = vmatprep.subr.bf16.mxu0 0
        %648 = vmatpush1.bf16.msra.mxu0 0
        %649 = vmatprep.subr.bf16.mxu0 0
        %650 = vmatpush1.bf16.msra.mxu0 0
        %651 = vmatprep.subr.bf16.mxu0 0
        %652 = vmatpush1.bf16.msra.mxu0 0
        %653 = vmatprep.mubr.bf16.mxu0 0
        %654 = vmatmul.mubr.bf16.gmra.mrb[0].mxu0 %v615
        %v655 = vpop.f32.mrb[0].mxu0
        %v656 = vadd.f32 0.0, %v655
        %v657 = vpop.f32.mrb[0].mxu0
        %v658 = vpop.f32.mrb[0].mxu0
        %v659 = vpop.f32.mrb[0].mxu0
        %660 = vdwg.mxu0
        %662 = vrot.lane.b32.xlu0 %v548, 120
        %v663 = vpop.permute.xlu0 %662
        %664 = vrot.lane.b32.xlu0 %v611, 120
        %v665 = vpop.permute.xlu0 %664
        %v667 = vsel %vm550, %v663, 0
        %v670 = vsel %vm550, %v665, 0
        %672 = vmatprep.subr.bf16.mxu0 0
        %673 = vmatpush1.bf16.xpose.msra.mxu0 %v670
        %674 = vmatprep.subr.bf16.mxu0 0
        %675 = vmatpush1.bf16.xpose.msra.mxu0 0
        %676 = vmatprep.subr.bf16.mxu0 0
        %677 = vmatpush1.bf16.xpose.msra.mxu0 0
        %678 = vmatprep.subr.bf16.mxu0 0
        %679 = vmatpush1.bf16.xpose.msra.mxu0 0
        %680 = vmatprep.subr.bf16.mxu0 0
        %681 = vmatpush1.bf16.xpose.msra.mxu0 0
        %682 = vmatprep.subr.bf16.mxu0 0
        %683 = vmatpush1.bf16.xpose.msra.mxu0 0
        %684 = vmatprep.subr.bf16.mxu0 0
        %685 = vmatpush1.bf16.xpose.msra.mxu0 0
        %686 = vmatprep.subr.bf16.mxu0 0
        %687 = vmatpush1.bf16.xpose.msra.mxu0 0
        %688 = vmatprep.subr.bf16.mxu0 0
        %689 = vmatpush1.bf16.xpose.msra.mxu0 0
        %690 = vmatprep.subr.bf16.mxu0 0
        %691 = vmatpush1.bf16.xpose.msra.mxu0 0
        %692 = vmatprep.subr.bf16.mxu0 0
        %693 = vmatpush1.bf16.xpose.msra.mxu0 0
        %694 = vmatprep.subr.bf16.mxu0 0
        %695 = vmatpush1.bf16.xpose.msra.mxu0 0
        %696 = vmatprep.subr.bf16.mxu0 0
        %697 = vmatpush1.bf16.xpose.msra.mxu0 0
        %698 = vmatprep.subr.bf16.mxu0 0
        %699 = vmatpush1.bf16.xpose.msra.mxu0 0
        %700 = vmatprep.subr.bf16.mxu0 0
        %701 = vmatpush1.bf16.xpose.msra.mxu0 0
        %702 = vmatprep.subr.bf16.mxu0 0
        %703 = vmatpush1.bf16.xpose.msra.mxu0 0
        %704 = vmatprep.mubr.bf16.mxu0 0
        %705 = vmatmul.mubr.bf16.gmra.mrb[0].mxu0 %v667
        %v706 = vpop.f32.mrb[0].mxu0
        %v707 = vadd.f32 0.0, %v706
        %v708 = vpop.f32.mrb[0].mxu0
        %v709 = vpop.f32.mrb[0].mxu0
        %v710 = vpop.f32.mrb[0].mxu0
        %711 = vdwg.mxu0
        %v712 = vsel %vm550, %v707, -inf
        %713 = vmax.xlane.f32.xlu0 %v712
        %v714 = vpop.xlane.xlu0 %713
        %v715 = vsub.f32 %v707, %v714
        %v716 = vmul.f32 %v715, 1.442695
        %v717 = vpow.pop %v716
        %v718 = vsel %vm550, %v717, 0.0
        %719 = vadd.xlane.f32.xlu0 %v718
        %v720 = vpop.xlane.xlu0 %719
        %v721 = vrcp.pop %v720
        %v722 = vmul.f32 %v717, %v721
        %v723 = vpack.c.bf16 %v722, %v722
        %724 = vrot.lane.b32.xlu0 %v611, 88
        %v725 = vpop.permute.xlu0 %724
        %v727 = vsel %vm550, %v723, 0
        %v730 = vsel %vm617, %v725, 0
        %732 = vmatprep.subr.bf16.mxu0 0
        %733 = vmatpush1.bf16.msra.mxu0 %v730
        %734 = vmatprep.subr.bf16.mxu0 0
        %735 = vmatpush1.bf16.msra.mxu0 0
        %736 = vmatprep.subr.bf16.mxu0 0
        %737 = vmatpush1.bf16.msra.mxu0 0
        %738 = vmatprep.subr.bf16.mxu0 0
        %739 = vmatpush1.bf16.msra.mxu0 0
        %740 = vmatprep.subr.bf16.mxu0 0
        %741 = vmatpush1.bf16.msra.mxu0 0
        %742 = vmatprep.subr.bf16.mxu0 0
        %743 = vmatpush1.bf16.msra.mxu0 0
        %744 = vmatprep.subr.bf16.mxu0 0
        %745 = vmatpush1.bf16.msra.mxu0 0
        %746 = vmatprep.subr.bf16.mxu0 0
        %747 = vmatpush1.bf16.msra.mxu0 0
        %748 = vmatprep.subr.bf16.mxu0 0
        %749 = vmatpush1.bf16.msra.mxu0 0
        %750 = vmatprep.subr.bf16.mxu0 0
        %751 = vmatpush1.bf16.msra.mxu0 0
        %752 = vmatprep.subr.bf16.mxu0 0
        %753 = vmatpush1.bf16.msra.mxu0 0
        %754 = vmatprep.subr.bf16.mxu0 0
        %755 = vmatpush1.bf16.msra.mxu0 0
        %756 = vmatprep.subr.bf16.mxu0 0
        %757 = vmatpush1.bf16.msra.mxu0 0
        %758 = vmatprep.subr.bf16.mxu0 0
        %759 = vmatpush1.bf16.msra.mxu0 0
        %760 = vmatprep.subr.bf16.mxu0 0
        %761 = vmatpush1.bf16.msra.mxu0 0
        %762 = vmatprep.subr.bf16.mxu0 0
        %763 = vmatpush1.bf16.msra.mxu0 0
        %764 = vmatprep.mubr.bf16.mxu0 0
        %765 = vmatmul.mubr.bf16.gmra.mrb[0].mxu0 %v727
        %v766 = vpop.f32.mrb[0].mxu0
        %v767 = vadd.f32 0.0, %v766
        %v768 = vpop.f32.mrb[0].mxu0
        %v769 = vpop.f32.mrb[0].mxu0
        %v770 = vpop.f32.mrb[0].mxu0
        %771 = vdwg.mxu0
        %772 = vrot.lane.b32.xlu0 %v548, 112
        %v773 = vpop.permute.xlu0 %772
        %774 = vrot.lane.b32.xlu0 %v611, 112
        %v775 = vpop.permute.xlu0 %774
        %v777 = vsel %vm550, %v773, 0
        %v780 = vsel %vm550, %v775, 0
        %782 = vmatprep.subr.bf16.mxu0 0
        %783 = vmatpush1.bf16.xpose.msra.mxu0 %v780
        %784 = vmatprep.subr.bf16.mxu0 0
        %785 = vmatpush1.bf16.xpose.msra.mxu0 0
        %786 = vmatprep.subr.bf16.mxu0 0
        %787 = vmatpush1.bf16.xpose.msra.mxu0 0
        %788 = vmatprep.subr.bf16.mxu0 0
        %789 = vmatpush1.bf16.xpose.msra.mxu0 0
        %790 = vmatprep.subr.bf16.mxu0 0
        %791 = vmatpush1.bf16.xpose.msra.mxu0 0
        %792 = vmatprep.subr.bf16.mxu0 0
        %793 = vmatpush1.bf16.xpose.msra.mxu0 0
        %794 = vmatprep.subr.bf16.mxu0 0
        %795 = vmatpush1.bf16.xpose.msra.mxu0 0
        %796 = vmatprep.subr.bf16.mxu0 0
        %797 = vmatpush1.bf16.xpose.msra.mxu0 0
        %798 = vmatprep.subr.bf16.mxu0 0
        %799 = vmatpush1.bf16.xpose.msra.mxu0 0
        %800 = vmatprep.subr.bf16.mxu0 0
        %801 = vmatpush1.bf16.xpose.msra.mxu0 0
        %802 = vmatprep.subr.bf16.mxu0 0
        %803 = vmatpush1.bf16.xpose.msra.mxu0 0
        %804 = vmatprep.subr.bf16.mxu0 0
        %805 = vmatpush1.bf16.xpose.msra.mxu0 0
        %806 = vmatprep.subr.bf16.mxu0 0
        %807 = vmatpush1.bf16.xpose.msra.mxu0 0
        %808 = vmatprep.subr.bf16.mxu0 0
        %809 = vmatpush1.bf16.xpose.msra.mxu0 0
        %810 = vmatprep.subr.bf16.mxu0 0
        %811 = vmatpush1.bf16.xpose.msra.mxu0 0
        %812 = vmatprep.subr.bf16.mxu0 0
        %813 = vmatpush1.bf16.xpose.msra.mxu0 0
        %814 = vmatprep.mubr.bf16.mxu0 0
        %815 = vmatmul.mubr.bf16.gmra.mrb[0].mxu0 %v777
        %v816 = vpop.f32.mrb[0].mxu0
        %v817 = vadd.f32 0.0, %v816
        %v818 = vpop.f32.mrb[0].mxu0
        %v819 = vpop.f32.mrb[0].mxu0
        %v820 = vpop.f32.mrb[0].mxu0
        %821 = vdwg.mxu0
        %v822 = vsel %vm550, %v817, -inf
        %823 = vmax.xlane.f32.xlu0 %v822
        %v824 = vpop.xlane.xlu0 %823
        %v825 = vsub.f32 %v817, %v824
        %v826 = vmul.f32 %v825, 1.442695
        %v827 = vpow.pop %v826
        %v828 = vsel %vm550, %v827, 0.0
        %829 = vadd.xlane.f32.xlu0 %v828
        %v830 = vpop.xlane.xlu0 %829
        %v831 = vrcp.pop %v830
        %v832 = vmul.f32 %v827, %v831
        %v833 = vpack.c.bf16 %v832, %v832
        %834 = vrot.lane.b32.xlu0 %v611, 80
        %v835 = vpop.permute.xlu0 %834
        %v837 = vsel %vm550, %v833, 0
        %v840 = vsel %vm617, %v835, 0
        %842 = vmatprep.subr.bf16.mxu0 0
        %843 = vmatpush1.bf16.msra.mxu0 %v840
        %844 = vmatprep.subr.bf16.mxu0 0
        %845 = vmatpush1.bf16.msra.mxu0 0
        %846 = vmatprep.subr.bf16.mxu0 0
        %847 = vmatpush1.bf16.msra.mxu0 0
        %848 = vmatprep.subr.bf16.mxu0 0
        %849 = vmatpush1.bf16.msra.mxu0 0
        %850 = vmatprep.subr.bf16.mxu0 0
        %851 = vmatpush1.bf16.msra.mxu0 0
        %852 = vmatprep.subr.bf16.mxu0 0
        %853 = vmatpush1.bf16.msra.mxu0 0
        %854 = vmatprep.subr.bf16.mxu0 0
        %855 = vmatpush1.bf16.msra.mxu0 0
        %856 = vmatprep.subr.bf16.mxu0 0
        %857 = vmatpush1.bf16.msra.mxu0 0
        %858 = vmatprep.subr.bf16.mxu0 0
        %859 = vmatpush1.bf16.msra.mxu0 0
        %860 = vmatprep.subr.bf16.mxu0 0
        %861 = vmatpush1.bf16.msra.mxu0 0
        %862 = vmatprep.subr.bf16.mxu0 0
        %863 = vmatpush1.bf16.msra.mxu0 0
        %864 = vmatprep.subr.bf16.mxu0 0
        %865 = vmatpush1.bf16.msra.mxu0 0
        %866 = vmatprep.subr.bf16.mxu0 0
        %867 = vmatpush1.bf16.msra.mxu0 0
        %868 = vmatprep.subr.bf16.mxu0 0
        %869 = vmatpush1.bf16.msra.mxu0 0
        %870 = vmatprep.subr.bf16.mxu0 0
        %871 = vmatpush1.bf16.msra.mxu0 0
        %872 = vmatprep.subr.bf16.mxu0 0
        %873 = vmatpush1.bf16.msra.mxu0 0
        %874 = vmatprep.mubr.bf16.mxu0 0
        %875 = vmatmul.mubr.bf16.gmra.mrb[0].mxu0 %v837
        %v876 = vpop.f32.mrb[0].mxu0
        %v877 = vadd.f32 0.0, %v876
        %v878 = vpop.f32.mrb[0].mxu0
        %v879 = vpop.f32.mrb[0].mxu0
        %v880 = vpop.f32.mrb[0].mxu0
        %881 = vdwg.mxu0
        %882 = vrot.lane.b32.xlu0 %v548, 104
        %v883 = vpop.permute.xlu0 %882
        %884 = vrot.lane.b32.xlu0 %v611, 104
        %v885 = vpop.permute.xlu0 %884
        %v887 = vsel %vm550, %v883, 0
        %v890 = vsel %vm550, %v885, 0
        %892 = vmatprep.subr.bf16.mxu0 0
        %893 = vmatpush1.bf16.xpose.msra.mxu0 %v890
        %894 = vmatprep.subr.bf16.mxu0 0
        %895 = vmatpush1.bf16.xpose.msra.mxu0 0
        %896 = vmatprep.subr.bf16.mxu0 0
        %897 = vmatpush1.bf16.xpose.msra.mxu0 0
        %898 = vmatprep.subr.bf16.mxu0 0
        %899 = vmatpush1.bf16.xpose.msra.mxu0 0
        %900 = vmatprep.subr.bf16.mxu0 0
        %901 = vmatpush1.bf16.xpose.msra.mxu0 0
        %902 = vmatprep.subr.bf16.mxu0 0
        %903 = vmatpush1.bf16.xpose.msra.mxu0 0
        %904 = vmatprep.subr.bf16.mxu0 0
        %905 = vmatpush1.bf16.xpose.msra.mxu0 0
        %906 = vmatprep.subr.bf16.mxu0 0
        %907 = vmatpush1.bf16.xpose.msra.mxu0 0
        %908 = vmatprep.subr.bf16.mxu0 0
        %909 = vmatpush1.bf16.xpose.msra.mxu0 0
        %910 = vmatprep.subr.bf16.mxu0 0
        %911 = vmatpush1.bf16.xpose.msra.mxu0 0
        %912 = vmatprep.subr.bf16.mxu0 0
        %913 = vmatpush1.bf16.xpose.msra.mxu0 0
        %914 = vmatprep.subr.bf16.mxu0 0
        %915 = vmatpush1.bf16.xpose.msra.mxu0 0
        %916 = vmatprep.subr.bf16.mxu0 0
        %917 = vmatpush1.bf16.xpose.msra.mxu0 0
        %918 = vmatprep.subr.bf16.mxu0 0
        %919 = vmatpush1.bf16.xpose.msra.mxu0 0
        %920 = vmatprep.subr.bf16.mxu0 0
        %921 = vmatpush1.bf16.xpose.msra.mxu0 0
        %922 = vmatprep.subr.bf16.mxu0 0
        %923 = vmatpush1.bf16.xpose.msra.mxu0 0
        %924 = vmatprep.mubr.bf16.mxu0 0
        %925 = vmatmul.mubr.bf16.gmra.mrb[0].mxu0 %v887
        %v926 = vpop.f32.mrb[0].mxu0
        %v927 = vadd.f32 0.0, %v926
        %v928 = vpop.f32.mrb[0].mxu0
        %v929 = vpop.f32.mrb[0].mxu0
        %v930 = vpop.f32.mrb[0].mxu0
        %931 = vdwg.mxu0
        %v932 = vsel %vm550, %v927, -inf
        %933 = vmax.xlane.f32.xlu0 %v932
        %v934 = vpop.xlane.xlu0 %933
        %v935 = vsub.f32 %v927, %v934
        %v936 = vmul.f32 %v935, 1.442695
        %v937 = vpow.pop %v936
        %v938 = vsel %vm550, %v937, 0.0
        %939 = vadd.xlane.f32.xlu0 %v938
        %v940 = vpop.xlane.xlu0 %939
        %v941 = vrcp.pop %v940
        %v942 = vmul.f32 %v937, %v941
        %v943 = vpack.c.bf16 %v942, %v942
        %944 = vrot.lane.b32.xlu0 %v611, 72
        %v945 = vpop.permute.xlu0 %944
        %v947 = vsel %vm550, %v943, 0
        %v950 = vsel %vm617, %v945, 0
        %952 = vmatprep.subr.bf16.mxu0 0
        %953 = vmatpush1.bf16.msra.mxu0 %v950
        %954 = vmatprep.subr.bf16.mxu0 0
        %955 = vmatpush1.bf16.msra.mxu0 0
        %956 = vmatprep.subr.bf16.mxu0 0
        %957 = vmatpush1.bf16.msra.mxu0 0
        %958 = vmatprep.subr.bf16.mxu0 0
        %959 = vmatpush1.bf16.msra.mxu0 0
        %960 = vmatprep.subr.bf16.mxu0 0
        %961 = vmatpush1.bf16.msra.mxu0 0
        %962 = vmatprep.subr.bf16.mxu0 0
        %963 = vmatpush1.bf16.msra.mxu0 0
        %964 = vmatprep.subr.bf16.mxu0 0
        %965 = vmatpush1.bf16.msra.mxu0 0
        %966 = vmatprep.subr.bf16.mxu0 0
        %967 = vmatpush1.bf16.msra.mxu0 0
        %968 = vmatprep.subr.bf16.mxu0 0
        %969 = vmatpush1.bf16.msra.mxu0 0
        %970 = vmatprep.subr.bf16.mxu0 0
        %971 = vmatpush1.bf16.msra.mxu0 0
        %972 = vmatprep.subr.bf16.mxu0 0
        %973 = vmatpush1.bf16.msra.mxu0 0
        %974 = vmatprep.subr.bf16.mxu0 0
        %975 = vmatpush1.bf16.msra.mxu0 0
        %976 = vmatprep.subr.bf16.mxu0 0
        %977 = vmatpush1.bf16.msra.mxu0 0
        %978 = vmatprep.subr.bf16.mxu0 0
        %979 = vmatpush1.bf16.msra.mxu0 0
        %980 = vmatprep.subr.bf16.mxu0 0
        %981 = vmatpush1.bf16.msra.mxu0 0
        %982 = vmatprep.subr.bf16.mxu0 0
        %983 = vmatpush1.bf16.msra.mxu0 0
        %984 = vmatprep.mubr.bf16.mxu0 0
        %985 = vmatmul.mubr.bf16.gmra.mrb[0].mxu0 %v947
        %v986 = vpop.f32.mrb[0].mxu0
        %v987 = vadd.f32 0.0, %v986
        %v988 = vpop.f32.mrb[0].mxu0
        %v989 = vpop.f32.mrb[0].mxu0
        %v990 = vpop.f32.mrb[0].mxu0
        %991 = vdwg.mxu0
        %993 = vrot.lane.b32.xlu0 %v767, 8
        %v994 = vpop.permute.xlu0 %993
        %997 = vrot.lane.b32.xlu0 %v877, 16
        %v998 = vpop.permute.xlu0 %997
        %1001 = vrot.lane.b32.xlu0 %v987, 24
        %v1002 = vpop.permute.xlu0 %1001
        %v1004 = vsel %vm550, %v656, %v994
        %vm1005 = vcmask 130048
        %v1006 = vsel %vm1005, %v1004, %v998
        %vm1007 = vcmask 195584
        %v1008 = vsel %vm1007, %v1006, %v1002
        %v1009 = vpack.c.bf16 %v1008, %v1008
        %vm1010 = vcmask 257024
        %1011 = vst.msk [vmem:[#allocation3] sm:$0xf] %vm1010, %v1009
        %v1012 = vld [vmem:[#allocation3] sm:$0xf]
        %v1013 = vld [vmem:[%s6] sm:$0xf]
        %v1014 = vld [vmem:[%s6 + $0x4] sm:$0xf]
        %v1015 = vld [vmem:[%s6 + $0x8] sm:$0xf]
        %v1016 = vld [vmem:[%s6 + $0xc] sm:$0xf]
        %v1017 = vld [vmem:[%s7] sm:$0x1]
        %v1019 = vlaneseq
        %v1020 = vshrl.u32 %v1019, 7
        %v1021 = vsub.s32 0, %v1020
        %v1022 = vrot.slane %v1017, %v1021
        %v1028 = vunpack.c.l.b16 %v1013
        %v1029 = vunpack.c.l.b16 %v1014
        %v1030 = vunpack.c.l.b16 %v1015
        %v1031 = vunpack.c.l.b16 %v1016
        %v1032 = vpack.c.b16 %v1029, %v1028
        %v1033 = vpack.c.b16 %v1031, %v1030
        %v1037 = vsel %vm504, %v1012, 0
        %1039 = vmatprep.subr.bf16.mxu0 0
        %1040 = vmatpush1.bf16.msra.mxu0 %v1032
        %1041 = vmatprep.subr.bf16.mxu0 0
        %1042 = vmatpush1.bf16.msra.mxu0 %v1033
        %1043 = vmatprep.subr.bf16.mxu0 0
        %1044 = vmatpush1.bf16.msra.mxu0 0
        %1045 = vmatprep.subr.bf16.mxu0 0
        %1046 = vmatpush1.bf16.msra.mxu0 0
        %1047 = vmatprep.subr.bf16.mxu0 0
        %1048 = vmatpush1.bf16.msra.mxu0 0
        %1049 = vmatprep.subr.bf16.mxu0 0
        %1050 = vmatpush1.bf16.msra.mxu0 0
        %1051 = vmatprep.subr.bf16.mxu0 0
        %1052 = vmatpush1.bf16.msra.mxu0 0
        %1053 = vmatprep.subr.bf16.mxu0 0
        %1054 = vmatpush1.bf16.msra.mxu0 0
        %1055 = vmatprep.subr.bf16.mxu0 0
        %1056 = vmatpush1.bf16.msra.mxu0 0
        %1057 = vmatprep.subr.bf16.mxu0 0
        %1058 = vmatpush1.bf16.msra.mxu0 0
        %1059 = vmatprep.subr.bf16.mxu0 0
        %1060 = vmatpush1.bf16.msra.mxu0 0
        %1061 = vmatprep.subr.bf16.mxu0 0
        %1062 = vmatpush1.bf16.msra.mxu0 0
        %1063 = vmatprep.subr.bf16.mxu0 0
        %1064 = vmatpush1.bf16.msra.mxu0 0
        %1065 = vmatprep.subr.bf16.mxu0 0
        %1066 = vmatpush1.bf16.msra.mxu0 0
        %1067 = vmatprep.subr.bf16.mxu0 0
        %1068 = vmatpush1.bf16.msra.mxu0 0
        %1069 = vmatprep.subr.bf16.mxu0 0
        %1070 = vmatpush1.bf16.msra.mxu0 0
        %1071 = vmatprep.mubr.bf16.mxu0 0
        %1072 = vmatmul.mubr.bf16.gmra.mrb[0].mxu0 %v1037
        %v1073 = vpop.f32.mrb[0].mxu0
        %v1074 = vadd.f32 %v1022, %v1073
        %v1075 = vpop.f32.mrb[0].mxu0
        %v1076 = vpop.f32.mrb[0].mxu0
        %v1077 = vpop.f32.mrb[0].mxu0
        %1078 = vdwg.mxu0
        %1079 = vst.msk [vmem:[%s403] sm:$0xff] %vm504, %v1074
        %s1080 = sand.u32 %s231, 1
        %s1081 = scalar_lea.sflag [#allocation6], %s1080
        %s1082 = sand.u32 %s231, 1
        %s1083 = smul.addr %s1082, 8
        %s1084 = scalar_lea.vmem [#allocation12], %s1083
        // Predicated region
        $region73: #{tpu_custom_call.1} parent=51 // pred_check
          %p1085 = pneg %p241
        $region74: #{tpu_custom_call.1} parent=51 // pred_check_branch
          %1087 = sbr.rel (%p1085) target = $region76
        $region75: #{tpu_custom_call.1} parent=51 // pred_region
          %s1089 = ssub.s32 128, 128
          %1090 = vsyncadd %s1081, %s1089
          %s1091 = sadd.s32 %s34, %s33
          %s1092 = smul.addr %s1091, 128
          %s1093 = scalar_lea.hbm %s8, %s1092
          %s1095 = sshll.u32 %s1084, 4
          %s1096 = int_to_ptr.vmem [resolvable:$true] %s1095
          %1098 = dma.vmem_to_hbm [thread:$0]  %s1096, 128, %s1093, %s1081
        $region76: #{tpu_custom_call.1} parent=51 // pred_fallthru
          _
      $region52: #{tpu_custom_call.1} parent=5 // pred_fallthru
        _
      %p1099 = scmp.le.s32.totalorder 2, %s24
      // Predicated region
      $region77: #{tpu_custom_call.1} parent=5 // pred_check
        %p1100 = pneg %p1099
      $region78: #{tpu_custom_call.1} parent=5 // pred_check_branch
        %1102 = sbr.rel (%p1100) target = $region80
      $region79: #{tpu_custom_call.1} parent=5 // pred_region
        %s1103 = ssub.s32 %s24, 2
        // Predicated region
        $region81: #{tpu_custom_call.1} parent=79 // pred_check
          %p1104 = pneg %p247
        $region82: #{tpu_custom_call.1} parent=79 // pred_check_branch
          %1106 = sbr.rel (%p1104) target = $region84
        $region83: #{tpu_custom_call.1} parent=79 // pred_region
          %s1107 = sand.u32 %s232, 1
          %s1108 = scalar_lea.sflag [#allocation6], %s1107
          %s1109 = sand.u32 %s232, 1
          %s1110 = smul.addr %s1109, 8
          %s1111 = scalar_lea.vmem [#allocation12], %s1110
          %1112 = dma.done %s1108, 128
        $region84: #{tpu_custom_call.1} parent=79 // pred_fallthru
          _
      $region80: #{tpu_custom_call.1} parent=5 // pred_fallthru
        _
    $region6: #{tpu_custom_call.1} parent=1 // loop_footer
      %s28 = sadd.s32 1, %s24
    $region7: #{tpu_custom_call.1} parent=1 // loop_footer_branch
      %23 = sbr.rel target = $region3
    $region8: #{tpu_custom_call.1} parent=1 // loop_exit
      _
    %1113 = vsyncpa [#allocation5], 1
    %s1114 = scalar_lea.sflag [#allocation5], 1
    %1115 = vsyncpa %s1114, 1
    %1116 = vsyncpa [#allocation8], 1
    %s1117 = scalar_lea.sflag [#allocation8], 1
    %1118 = vsyncpa %s1117, 1
    %1119 = vsyncpa [#allocation11], 1
    %1120 = vsyncpa [#allocation6], 1
    %s1121 = scalar_lea.sflag [#allocation6], 1
    %1122 = vsyncpa %s1121, 1

</llo_original>
